<compile_context>
chip_gen: v6e
topology: v6e:2x2x1
jax: 0.10.0
libtpu: 0.0.40
codegen_flags: <defaults>
</compile_context>

<pallas_src>
import functools

import jax
import jax.numpy as jnp
from jax import lax
from jax.experimental import pallas as pl
from jax.experimental.pallas import tpu as pltpu


def _ada_layer_norm_kernel(x_ref, scale_ref, shift_ref, o_ref, *, eps: float):
    # x_ref: (TM, D) tile of rows; scale_ref/shift_ref: (1, D), broadcast over rows.
    # Accumulate in f32 (required on v5e which has no bf16 VPU; good numerics
    # everywhere). Two-pass (mean -> centered var) is kept for stability; the
    # kernel is memory-bound at full tiles so the extra VALU/XLU pass is hidden.
    x = x_ref[...].astype(jnp.float32)
    mean = jnp.mean(x, axis=-1, keepdims=True)
    xc = x - mean
    var = jnp.mean(xc * xc, axis=-1, keepdims=True)
    inv = lax.rsqrt(var + eps)
    y = xc * inv
    y = y * scale_ref[...].astype(jnp.float32) + shift_ref[...].astype(jnp.float32)
    o_ref[...] = y.astype(o_ref.dtype)


def _round_up(x: int, m: int) -> int:
    return ((x + m - 1) // m) * m


def _pick_tiling(rows: int, d: int, dtype) -> tuple[int, int]:
    """Choose (row_tile, vmem_limit_bytes) from the generation's VMEM capacity."""
    itemsize = jnp.dtype(dtype).itemsize
    try:
        vmem_cap = int(pltpu.get_tpu_info().vmem_capacity_bytes)
    except Exception:  # interpret mode / query failure: assume smallest (v7x 64 MiB/TC)
        vmem_cap = 64 * 1024 * 1024

    # Budget ~1/4 of VMEM (capped at 16 MiB) for this kernel's live set:
    # double-buffered input + output tiles plus f32 intermediates of the tile.
    budget = min(vmem_cap // 4, 16 * 1024 * 1024)
    per_row_bytes = 4 * d * itemsize + 4 * d * 4  # 2x(in+out) bufs + f32 temps
    tm = budget // per_row_bytes

    # ~512 rows already gives ~85% of HBM roofline; prefer more grid steps over
    # bigger tiles so the pipeline has prologue/epilogue overlap and v7x's two
    # TensorCores each get a fair share of steps.
    tm = max(8, min(int(tm), 512))
    tm = min(tm, max(256, _round_up((rows + 7) // 8, 16)))  # aim for >= ~8 steps
    tm = max(8, (tm // 8) * 8)                              # sublane-aligned
    tm = min(tm, _round_up(rows, 8))                        # don't over-tile tiny inputs

    # Scoped-VMEM limit covering the working set with headroom, hard-capped at
    # 48 MiB so v7x (64 MiB/TC physical) keeps room for Mosaic internal scratch.
    vmem_limit = int(min(vmem_cap // 2, 48 * 1024 * 1024))
    return tm, vmem_limit


def ada_layer_norm(x, cond_embedding_id, scale_weight, shift_weight,
                   *, eps: float = 1e-6, row_tile: int | None = None,
                   out_dtype=None):
    """AdaLayerNorm forward.

    Args:
      x: (B, T, D) activations.
      cond_embedding_id: scalar or shape-(1,) int32 class index (as in vocos).
      scale_weight: (num_embeddings, D) embedding table (init: ones).
      shift_weight: (num_embeddings, D) embedding table (init: zeros).
      out_dtype: optional output dtype (e.g. jnp.bfloat16); defaults to x.dtype.
        Accumulation inside the kernel stays f32 regardless.
    Returns:
      (B, T, D) array of dtype `out_dtype`.
    """
    B, T, D = x.shape
    out_dtype = x.dtype if out_dtype is None else out_dtype

    # Glue: embedding gather (indexing) stays in plain JAX. Accept scalar or
    # (1,)-shaped index; always present (1, D) tiles to the kernel.
    scale = jnp.reshape(scale_weight[cond_embedding_id], (1, D))
    shift = jnp.reshape(shift_weight[cond_embedding_id], (1, D))

    rows = B * T
    x2 = x.reshape(rows, D)

    tm, vmem_limit = _pick_tiling(rows, D, x.dtype)
    if row_tile is not None:
        tm = row_tile
    grid = (pl.cdiv(rows, tm),)   # partial last block: padded reads, masked writes

    in_bytes = jnp.dtype(x.dtype).itemsize
    out_bytes = jnp.dtype(out_dtype).itemsize
    cost = pl.CostEstimate(
        flops=8 * rows * D,               # sub/mul/mul/add + reductions
        transcendentals=rows,             # one rsqrt per row
        bytes_accessed=rows * D * (in_bytes + out_bytes) + 2 * D * 4,
    )

    out2 = pl.pallas_call(
        functools.partial(_ada_layer_norm_kernel, eps=eps),
        out_shape=jax.ShapeDtypeStruct((rows, D), out_dtype),
        grid_spec=pltpu.PrefetchScalarGridSpec(
            num_scalar_prefetch=0,
            grid=grid,
            in_specs=[
                pl.BlockSpec((tm, D), lambda i: (i, 0)),   # x rows tile
                pl.BlockSpec((1, D), lambda i: (0, 0)),    # scale (broadcast)
                pl.BlockSpec((1, D), lambda i: (0, 0)),    # shift (broadcast)
            ],
            out_specs=pl.BlockSpec((tm, D), lambda i: (i, 0)),
        ),
        compiler_params=pltpu.CompilerParams(
            dimension_semantics=("parallel",),   # megacore: rows across v7x's 2 TCs
            vmem_limit_bytes=vmem_limit,
        ),
        cost_estimate=cost,
    )(x2, scale, shift)

    return out2.reshape(B, T, D)


if __name__ == "__main__":
    key = jax.random.PRNGKey(0)
    B, T, D = 2, 8, 32   # NOTE: production vocos uses D=512 (lane-dense multiple of 128)
    num_embeddings = 4

    kx, = jax.random.split(key, 1)
    x = jax.random.normal(kx, (B, T, D), dtype=jnp.float32)
    cond_embedding_id = jnp.array([1], dtype=jnp.int32)

    # Deterministic parameter init matching the module's __init__:
    # scale embedding -> ones, shift embedding -> zeros.
    scale_weight = jnp.ones((num_embeddings, D), dtype=jnp.float32)
    shift_weight = jnp.zeros((num_embeddings, D), dtype=jnp.float32)

    out = ada_layer_norm(x, cond_embedding_id, scale_weight, shift_weight)
    out = jax.block_until_ready(out)

    # Reference check in plain JAX (layer_norm without elementwise affine).
    mean = jnp.mean(x, axis=-1, keepdims=True)
    var = jnp.mean((x - mean) ** 2, axis=-1, keepdims=True)
    ref = (x - mean) / jnp.sqrt(var + 1e-6)
    ref = ref * scale_weight[cond_embedding_id][:, None, :] \
        + shift_weight[cond_embedding_id][:, None, :]
    assert jnp.allclose(out, ref, atol=1e-5, rtol=1e-5), "mismatch vs reference"

    # Also exercise the scalar-index path (robustness fix from review).
    out_scalar = ada_layer_norm(x, jnp.int32(1), scale_weight, shift_weight)
    out_scalar = jax.block_until_ready(out_scalar)
    assert jnp.allclose(out_scalar, ref, atol=1e-5, rtol=1e-5), "scalar-id mismatch"

    print("KERNEL_OK")
</pallas_src>

<mosaic_0001>
module attributes {stable_mosaic.version = 11 : i64} {
  func.func @_ada_layer_norm_kernel(%arg0: i32, %arg1: memref<16x32xf32, #tpu.memory_space<vmem>>, %arg2: memref<1x32xf32, #tpu.memory_space<vmem>>, %arg3: memref<1x32xf32, #tpu.memory_space<vmem>>, %arg4: memref<16x32xf32, #tpu.memory_space<vmem>>) attributes {dimension_semantics = [#tpu.dimension_semantics<parallel>], iteration_bounds = array<i64: 1>, scalar_prefetch = 0 : i64, scratch_operands = 0 : i64, tpu.core_type = #tpu.core_type<tc>, window_params = [{transform_indices = @transform_0, window_bounds = array<i64: 16, 32>}, {pipeline_mode = #tpu.pipeline_mode<synchronous>, transform_indices = @transform_1, window_bounds = array<i64: 1, 32>}, {pipeline_mode = #tpu.pipeline_mode<synchronous>, transform_indices = @transform_2, window_bounds = array<i64: 1, 32>}, {transform_indices = @transform_3, window_bounds = array<i64: 16, 32>}]} {
    %c0 = arith.constant 0 : index
    %c0_0 = arith.constant 0 : index
    %0 = vector.load %arg1[%c0, %c0_0] : memref<16x32xf32, #tpu.memory_space<vmem>>, vector<16x32xf32>
    %cst = arith.constant dense<0.000000e+00> : vector<16xf32>
    %1 = vector.multi_reduction <add>, %0, %cst [1] : vector<16x32xf32> to vector<16xf32>
    %2 = vector.shape_cast %1 : vector<16xf32> to vector<16x1xf32>
    %cst_1 = arith.constant 3.200000e+01 : f32
    %3 = vector.broadcast %cst_1 : f32 to vector<16x1xf32>
    %4 = arith.divf %2, %3 : vector<16x1xf32>
    %5 = vector.broadcast %4 : vector<16x1xf32> to vector<16x32xf32>
    %6 = arith.subf %0, %5 : vector<16x32xf32>
    %7 = arith.mulf %6, %6 : vector<16x32xf32>
    %cst_2 = arith.constant dense<0.000000e+00> : vector<16xf32>
    %8 = vector.multi_reduction <add>, %7, %cst_2 [1] : vector<16x32xf32> to vector<16xf32>
    %9 = vector.shape_cast %8 : vector<16xf32> to vector<16x1xf32>
    %cst_3 = arith.constant 3.200000e+01 : f32
    %10 = vector.broadcast %cst_3 : f32 to vector<16x1xf32>
    %11 = arith.divf %9, %10 : vector<16x1xf32>
    %cst_4 = arith.constant 9.99999997E-7 : f32
    %12 = vector.broadcast %cst_4 : f32 to vector<16x1xf32>
    %13 = arith.addf %11, %12 : vector<16x1xf32>
    %14 = math.rsqrt %13 : vector<16x1xf32>
    %15 = vector.broadcast %14 : vector<16x1xf32> to vector<16x32xf32>
    %16 = arith.mulf %6, %15 : vector<16x32xf32>
    %c0_5 = arith.constant 0 : index
    %c0_6 = arith.constant 0 : index
    %17 = vector.load %arg2[%c0_5, %c0_6] : memref<1x32xf32, #tpu.memory_space<vmem>>, vector<1x32xf32>
    %18 = vector.broadcast %17 : vector<1x32xf32> to vector<16x32xf32>
    %19 = arith.mulf %16, %18 : vector<16x32xf32>
    %c0_7 = arith.constant 0 : index
    %c0_8 = arith.constant 0 : index
    %20 = vector.load %arg3[%c0_7, %c0_8] : memref<1x32xf32, #tpu.memory_space<vmem>>, vector<1x32xf32>
    %21 = vector.broadcast %20 : vector<1x32xf32> to vector<16x32xf32>
    %22 = arith.addf %19, %21 : vector<16x32xf32>
    %c0_9 = arith.constant 0 : index
    %c0_10 = arith.constant 0 : index
    %23 = vector.load %arg4[%c0_9, %c0_10] : memref<16x32xf32, #tpu.memory_space<vmem>>, vector<16x32xf32>
    tpu.vector_store %arg4[%c0_9, %c0_10], %22 {strides = array<i32>} : memref<16x32xf32, #tpu.memory_space<vmem>>, vector<16x32xf32>,
    return
  }
  func.func @transform_0(%arg0: i32) -> (i32, i32) {
    %c0_i32 = arith.constant 0 : i32
    %c0_i32_0 = arith.constant 0 : i32
    return %arg0, %c0_i32 : i32, i32
  }
  func.func @transform_1(%arg0: i32) -> (i32, i32) {
    %c0_i32 = arith.constant 0 : i32
    %c0_i32_0 = arith.constant 0 : i32
    %c0_i32_1 = arith.constant 0 : i32
    return %c0_i32, %c0_i32_0 : i32, i32
  }
  func.func @transform_2(%arg0: i32) -> (i32, i32) {
    %c0_i32 = arith.constant 0 : i32
    %c0_i32_0 = arith.constant 0 : i32
    %c0_i32_1 = arith.constant 0 : i32
    return %c0_i32, %c0_i32_0 : i32, i32
  }
  func.func @transform_3(%arg0: i32) -> (i32, i32) {
    %c0_i32 = arith.constant 0 : i32
    %c0_i32_0 = arith.constant 0 : i32
    return %arg0, %c0_i32 : i32, i32
  }
}

</mosaic_0001>

<llo_original>
// kernel: tpu_custom_call.1
$region0: #{tpu_custom_call.1}
  #allocation0 [shape = 'u32[]', space=smem, size = 0x4, offset = 0x4, fixed_abs, tag = 'smem constant byte address 0x4 - core index']
  #allocation1 [shape = 'u32[144,128]{1,0:T(1,128)}', space=vmem, size = 0x12000, scoped, tag = 'internal scratch']
  %s0 = inlined_call_operand.hbm [shape: f32[16,32], index: 0, kind: input, shape index: {}]
  %s1 = inlined_call_operand.vmem [shape: f32[1,32], index: 1, kind: input, shape index: {}]
  %s2 = inlined_call_operand.vmem [shape: f32[1,32], index: 2, kind: input, shape index: {}]
  %s3 = inlined_call_operand.hbm [shape: f32[16,32], index: 3, kind: output, shape index: {}]
  %s4 = sld [smem:[#allocation0]]
  $region26: #{tpu_custom_call.1} parent=0
    _
  %s6 = ssub.s32 1, %s4
  %s7 = scalar_select 0, %s6, %s4
  $region1: #{tpu_custom_call.1} parent=0
    #allocation2 [shape = 'u8[8192]{0}', space=vmem, size = 0x2000, scoped, tag = 'input window, operand 0, single buffered']
    #allocation3 [shape = 's32[1]{0}', space=sflag, size = 0x4, scoped, tag = 'scoped memory for tpu_custom_call.1']
    #allocation4 [shape = 's32[1]{0}', space=sflag, size = 0x4, scoped, tag = 'scoped memory for tpu_custom_call.1']
    #allocation5 [shape = 'u8[8192]{0}', space=vmem, size = 0x2000, scoped, tag = 'output window, operand 0, single buffered']
    %8 = vsyncpa [#allocation3], 0
    %9 = vsyncpa [#allocation4], 0
    // Predicated region
    $region2: #{tpu_custom_call.1} parent=1 // pred_check
      _
    $region3: #{tpu_custom_call.1} parent=1 // pred_check_branch
      %11 = sbr.rel (0) target = $region5
    $region4: #{tpu_custom_call.1} parent=1 // pred_region
      %s13 = ssub.s32 256, 256
      %14 = vsyncadd [#allocation3], %s13
      %s15 = sshll.u32 [#allocation2], 4
      %s16 = int_to_ptr.vmem [resolvable:$true] %s15
      %21 = dma.hbm_to_vmem [thread:$0]  %s0, 256, %s16, [#allocation3], 128, 128, 8
    $region5: #{tpu_custom_call.1} parent=1 // pred_fallthru
      _
    // Predicated region
    $region6: #{tpu_custom_call.1} parent=1 // pred_check
      _
    $region7: #{tpu_custom_call.1} parent=1 // pred_check_branch
      %23 = sbr.rel (0) target = $region9
    $region8: #{tpu_custom_call.1} parent=1 // pred_region
      _
    $region9: #{tpu_custom_call.1} parent=1 // pred_fallthru
      _
    // Predicated region
    $region10: #{tpu_custom_call.1} parent=1 // pred_check
      _
    $region11: #{tpu_custom_call.1} parent=1 // pred_check_branch
      %25 = sbr.rel (0) target = $region13
    $region12: #{tpu_custom_call.1} parent=1 // pred_region
      _
    $region13: #{tpu_custom_call.1} parent=1 // pred_fallthru
      _
    // Predicated region
    $region14: #{tpu_custom_call.1} parent=1 // pred_check
      _
    $region15: #{tpu_custom_call.1} parent=1 // pred_check_branch
      %27 = sbr.rel (0) target = $region17
    $region16: #{tpu_custom_call.1} parent=1 // pred_region
      %28 = dma.done [#allocation3], 256
    $region17: #{tpu_custom_call.1} parent=1 // pred_fallthru
      _
    %v29 = vld [vmem:[#allocation2] sm:$0xff]
    %v30 = vld [vmem:[#allocation2 + $0x8] sm:$0xff]
    %vm31 = vcmask 261120
    %v32 = vsel %vm31, %v29, 0.0
    %33 = vadd.xlane.f32.xlu0 %v32
    %v34 = vpop.xlane.xlu0 %33
    %v35 = vsel %vm31, %v30, 0.0
    %36 = vadd.xlane.f32.xlu0 %v35
    %v37 = vpop.xlane.xlu0 %36
    %v38 = vrcp.pop 32.0
    %v39 = vmul.f32 %v34, %v38
    %v40 = vmul.f32 %v37, %v38
    %v41 = vsub.f32 %v29, %v39
    %v42 = vsub.f32 %v30, %v40
    %v43 = vmul.f32 %v41, %v41
    %v44 = vmul.f32 %v42, %v42
    %v45 = vsel %vm31, %v43, 0.0
    %46 = vadd.xlane.f32.xlu0 %v45
    %v47 = vpop.xlane.xlu0 %46
    %v48 = vsel %vm31, %v44, 0.0
    %49 = vadd.xlane.f32.xlu0 %v48
    %v50 = vpop.xlane.xlu0 %49
    %v51 = vmul.f32 %v47, %v38
    %v52 = vmul.f32 %v50, %v38
    %v53 = vadd.f32 %v51, 1e-06
    %v54 = vadd.f32 %v52, 1e-06
    %v55 = vrsqrt.pop %v53
    %v56 = vrsqrt.pop %v54
    %v57 = vmul.f32 %v41, %v55
    %v58 = vmul.f32 %v42, %v56
    %v59 = vld [vmem:[%s1] sm:$0x1]
    %v61 = vlaneseq
    %v62 = vshrl.u32 %v61, 7
    %v63 = vsub.s32 0, %v62
    %v64 = vrot.slane %v59, %v63
    %v66 = vmul.f32 %v57, %v64
    %v67 = vmul.f32 %v58, %v64
    %v68 = vld [vmem:[%s2] sm:$0x1]
    %v70 = vlaneseq
    %v71 = vshrl.u32 %v70, 7
    %v72 = vsub.s32 0, %v71
    %v73 = vrot.slane %v68, %v72
    %v75 = vadd.f32 %v66, %v73
    %v76 = vadd.f32 %v67, %v73
    %77 = vst.msk [vmem:[#allocation5] sm:$0xff] %vm31, %v75
    %78 = vst.msk [vmem:[#allocation5 + $0x8] sm:$0xff] %vm31, %v76
    // Predicated region
    $region18: #{tpu_custom_call.1} parent=1 // pred_check
      _
    $region19: #{tpu_custom_call.1} parent=1 // pred_check_branch
      %80 = sbr.rel (0) target = $region21
    $region20: #{tpu_custom_call.1} parent=1 // pred_region
      %s82 = ssub.s32 256, 256
      %83 = vsyncadd [#allocation4], %s82
      %s84 = sshll.u32 [#allocation5], 4
      %s85 = int_to_ptr.vmem [resolvable:$true] %s84
      %90 = dma.vmem_to_hbm [thread:$0]  %s85, 256, %s3, [#allocation4], 128, 128, 8
    $region21: #{tpu_custom_call.1} parent=1 // pred_fallthru
      _
    // Predicated region
    $region22: #{tpu_custom_call.1} parent=1 // pred_check
      _
    $region23: #{tpu_custom_call.1} parent=1 // pred_check_branch
      %92 = sbr.rel (0) target = $region25
    $region24: #{tpu_custom_call.1} parent=1 // pred_region
      %93 = dma.done [#allocation4], 256
    $region25: #{tpu_custom_call.1} parent=1 // pred_fallthru
      _
    %94 = vsyncpa [#allocation3], 1
    %95 = vsyncpa [#allocation4], 1

</llo_original>
